<compile_context>
chip_gen: v7x
topology: tpu7x:2x2x1
jax: 0.10.0
libtpu: 0.0.40
codegen_flags: <defaults>
</compile_context>

<pallas_src>
import jax
import jax.numpy as jnp
from jax.experimental import pallas as pl
from jax.experimental.pallas import tpu as pltpu


def _attention_agg_kernel(x_ref, w1_ref, b1_ref, w2_ref, b2_ref, o_ref):
    """One grid step processes a (TB, S, D) slab of batch elements.

    x_ref : (TB, S, D)  input slab                          (VMEM)
    w1_ref: (D, H)      fc1 weight, pre-transposed          (VMEM)
    b1_ref: (1, H)      fc1 bias (f32)                      (VMEM)
    w2_ref: (1, H)      fc2 weight as a row vector (f32)    (VMEM)
    b2_ref: (1, 1)      fc2 bias scalar (f32)               (SMEM)
    o_ref : (TB, D)     output slab                         (VMEM)
    """
    TB, S, D = x_ref.shape
    H = w1_ref.shape[1]

    # ---- fc1 + tanh: one tall MXU matmul over all TB*S rows ---------------
    # f32 accumulation via preferred_element_type; bias add + tanh in f32
    # (safe on v5e even when x/W1 are streamed as bf16).
    h = jnp.tanh(
        jnp.dot(x_ref[...].reshape(TB * S, D), w1_ref[...],
                preferred_element_type=jnp.float32)
        + b1_ref[...]
    ).reshape(TB, S, H)                                      # (TB, S, H) f32

    # ---- fc2 scores: VPU multiply + lane reduce, lane-dense (TB, S) --------
    # Avoids the M=1 batched einsum (per-batch XLU transpose of each (S,H)
    # slice, 1/128-1/256 MXU row utilization) and the (TB,1,H) w2 broadcast.
    s = jnp.sum(h * w2_ref[...].reshape(1, 1, H), axis=-1)   # (TB, S)
    s = s + b2_ref[0, 0]                                     # scalar from SMEM

    # ---- softmax over the sequence axis (last axis -> lane reductions) -----
    s = s - jnp.max(s, axis=-1, keepdims=True)
    e = jnp.exp(s)
    # approx=True would push the divide onto the otherwise-idle EUP slot;
    # kept exact so the f32 reference check holds at 1e-5 tolerance.
    wgt = e * pl.reciprocal(jnp.sum(e, axis=-1, keepdims=True), approx=False)

    # ---- weighted reduction over S -----------------------------------------
    # Re-read x from VMEM near the use site (don't keep the slab live across
    # fc1 -> softmax).  MXU batched matvec; hidden under the HBM stream.
    # TODO(synk): benchmark vs. the VPU broadcast-multiply + sublane reduce on
    # v5e/v6e if the vxe slot ever saturates (MRF drain on M=1 matmuls).
    out = jnp.einsum("bqs,bsd->bqd", wgt[:, None, :], x_ref[...],
                     preferred_element_type=jnp.float32)     # (TB, 1, D)
    o_ref[...] = out.reshape(TB, D).astype(o_ref.dtype)      # lane-dense store


def _tpu_tiling_params():
    """Per-generation (min_grid_steps, vmem_limit_bytes, working_set_budget)."""
    kind = ""
    try:
        kind = jax.devices()[0].device_kind.lower()
    except Exception:
        pass
    if "v5p" in kind or "v4" in kind:
        # Megacore (2 TCs), 128 MiB VMEM: split the grid, still big tiles.
        return 4, 100 * 1024 * 1024, 28 * 1024 * 1024
    if "v5" in kind or "v6" in kind:
        # v5e / v6e: single TensorCore, 128 MiB VMEM -> big tiles, no split.
        return 1, 100 * 1024 * 1024, 32 * 1024 * 1024
    # v7x / unknown: 2 TCs, 64 MiB VMEM per core -> >=2 steps per core and a
    # tighter per-step working-set budget under the 48 MiB scoped cap.
    return 4, 48 * 1024 * 1024, 14 * 1024 * 1024


def _choose_block_batch(B, S, D, H, x_itemsize, *, vmem_budget_bytes,
                        min_grid_steps):
    """Pick TB (batch tile) such that:
       * TB divides B,
       * TB is a multiple of 8 (unmasked sublane-aligned output stores) or ==B,
       * the per-step working set fits the VMEM budget,
       * the grid has >= min_grid_steps steps when possible."""
    # Per-batch-element VMEM cost per step: double-buffered x slab + f32 h
    # temp (spills to VMEM) + double-buffered output row.
    per_batch = 2 * S * D * x_itemsize + S * H * 4 + 2 * D * x_itemsize
    cap = min(B,
              max(1, vmem_budget_bytes // per_batch),
              max(1, B // max(1, min_grid_steps)))
    # Prefer the largest multiple of 8 <= cap that divides B.
    for t in range((cap // 8) * 8, 7, -8):
        if B % t == 0:
            return t
    if B % 8 == 0:
        return 8            # sublane alignment beats the step-count target
    if B <= cap:
        return B            # whole batch in one step (block == full dim)
    for t in range(cap, 0, -1):   # last resort: any divisor of B under the cap
        if B % t == 0:
            return t
    return B


def attention_agg(inp, w1, b1, w2, b2, *, batch_first=True, block_batch=None,
                  stream_dtype=None):
    """inp: (B, S, D) if batch_first else (S, B, D). Returns (B, D).

    w1: (D, H) = fc1.weight.T, b1: (H,), w2: (H, 1) = fc2.weight.T, b2: (1,).
    stream_dtype: optionally stream inp/W1 in a narrower dtype (e.g.
    jnp.bfloat16 on v6e/v7x) — the kernel is HBM-bound, so this roughly halves
    wall time; accumulation / tanh / softmax stay in f32 (v5e-safe).
    For best layouts keep S a multiple of 8 and D, H multiples of 128.
    """
    if not batch_first:
        inp = jnp.transpose(inp, (1, 0, 2))
    B, S, D = inp.shape
    H = w1.shape[1]
    out_dtype = inp.dtype

    if stream_dtype is not None:
        inp = inp.astype(stream_dtype)
        w1 = w1.astype(stream_dtype)

    x_itemsize = jnp.dtype(inp.dtype).itemsize
    w_itemsize = jnp.dtype(w1.dtype).itemsize

    min_grid_steps, vmem_limit, working_budget = _tpu_tiling_params()
    # Reserve room for the (double-buffered) W1 tile; the rest of the budget
    # goes to the per-step x / h / out working set.
    # TODO(synk): pipeline_mode=pl.Buffered(1) on the W1 BlockSpec would
    # reclaim the second (never-refetched) W1 buffer for a bigger x tile.
    budget = max(1 << 20, working_budget - 2 * D * H * w_itemsize)

    if block_batch is not None:
        tb = block_batch
    else:
        tb = _choose_block_batch(B, S, D, H, x_itemsize,
                                 vmem_budget_bytes=budget,
                                 min_grid_steps=min_grid_steps)
    assert B % tb == 0, (B, tb)

    b1_2d = b1.reshape(1, H).astype(jnp.float32)
    w2_row = w2.reshape(1, H).astype(jnp.float32)   # fc2 weight as a row vector
    b2_2d = b2.reshape(1, 1).astype(jnp.float32)    # scalar bias -> SMEM

    cost = pl.CostEstimate(
        flops=2 * B * S * D * H + 2 * B * S * H + 2 * B * S * D,
        transcendentals=B * S * H + B * S,
        bytes_accessed=(B * S * D * x_itemsize
                        + B * D * jnp.dtype(out_dtype).itemsize
                        + D * H * w_itemsize + (2 * H + 1) * 4),
    )

    return pl.pallas_call(
        _attention_agg_kernel,
        out_shape=jax.ShapeDtypeStruct((B, D), out_dtype),
        grid_spec=pltpu.PrefetchScalarGridSpec(
            num_scalar_prefetch=0,
            grid=(B // tb,),
            in_specs=[
                pl.BlockSpec((tb, S, D), lambda b: (b, 0, 0)),      # x slab
                pl.BlockSpec((D, H), lambda b: (0, 0)),             # W1 (full)
                pl.BlockSpec((1, H), lambda b: (0, 0)),             # b1
                pl.BlockSpec((1, H), lambda b: (0, 0)),             # W2 row
                pl.BlockSpec(memory_space=pltpu.MemorySpace.SMEM),  # b2 scalar
            ],
            out_specs=pl.BlockSpec((tb, D), lambda b: (b, 0)),      # lane-dense
        ),
        compiler_params=pltpu.CompilerParams(
            dimension_semantics=("parallel",),   # independent batch slabs
            vmem_limit_bytes=vmem_limit,
        ),
        cost_estimate=cost,
    )(inp, w1, b1_2d, w2_row, b2_2d)


def reference_attention_agg(inp, w1, b1, w2, b2):
    """Pure-JAX reference mirroring the PyTorch forward."""
    h = jnp.tanh(inp @ w1 + b1)            # (B, S, H)
    s = h @ w2 + b2                        # (B, S, 1)
    weights = jax.nn.softmax(s, axis=1)    # softmax over seq
    return jnp.sum(weights * inp, axis=1)  # (B, D)


if __name__ == "__main__":
    # Small shapes consistent with the module: in_feats=D, out_feats=H.
    B, S, D, H = 16, 8, 128, 64

    key = jax.random.PRNGKey(0)
    k_x, k_w1, k_b1, k_w2, k_b2 = jax.random.split(key, 5)

    # PyTorch Linear weight is (out, in); stored pre-transposed as (in, out).
    inp = jax.random.normal(k_x, (B, S, D), dtype=jnp.float32)
    w1 = jax.random.normal(k_w1, (D, H), dtype=jnp.float32) * 0.1   # fc1.weight.T
    b1 = jax.random.normal(k_b1, (H,), dtype=jnp.float32) * 0.1     # fc1.bias
    w2 = jax.random.normal(k_w2, (H, 1), dtype=jnp.float32) * 0.1   # fc2.weight.T
    b2 = jax.random.normal(k_b2, (1,), dtype=jnp.float32) * 0.1     # fc2.bias

    # block_batch=8 -> 2 grid steps with sublane-aligned (8, D) output blocks.
    out = attention_agg(inp, w1, b1, w2, b2, block_batch=8)
    out = jax.block_until_ready(out)

    ref = reference_attention_agg(inp, w1, b1, w2, b2)
    assert out.shape == (B, D), out.shape
    assert jnp.allclose(out, ref, atol=1e-5, rtol=1e-5), (
        f"max abs err = {jnp.max(jnp.abs(out - ref))}"
    )

    print("KERNEL_OK")
</pallas_src>

<mosaic_0001>
module attributes {stable_mosaic.version = 11 : i64} {
  func.func @_attention_agg_kernel(%arg0: i32, %arg1: memref<8x8x128xf32, #tpu.memory_space<vmem>>, %arg2: memref<128x64xf32, #tpu.memory_space<vmem>>, %arg3: memref<1x64xf32, #tpu.memory_space<vmem>>, %arg4: memref<1x64xf32, #tpu.memory_space<vmem>>, %arg5: memref<1x1xf32, #tpu.memory_space<smem>>, %arg6: memref<8x128xf32, #tpu.memory_space<vmem>>) attributes {dimension_semantics = [#tpu.dimension_semantics<parallel>], iteration_bounds = array<i64: 2>, scalar_prefetch = 0 : i64, scratch_operands = 0 : i64, tpu.core_type = #tpu.core_type<tc>, window_params = [{transform_indices = @transform_0, window_bounds = array<i64: 8, 8, 128>}, {pipeline_mode = #tpu.pipeline_mode<synchronous>, transform_indices = @transform_1, window_bounds = array<i64: 128, 64>}, {pipeline_mode = #tpu.pipeline_mode<synchronous>, transform_indices = @transform_2, window_bounds = array<i64: 1, 64>}, {pipeline_mode = #tpu.pipeline_mode<synchronous>, transform_indices = @transform_3, window_bounds = array<i64: 1, 64>}, {transform_indices = @transform_4, window_bounds = array<i64: 1, 1>}, {transform_indices = @transform_5, window_bounds = array<i64: 8, 128>}]} {
    %c0 = arith.constant 0 : index
    %c0_0 = arith.constant 0 : index
    %c0_1 = arith.constant 0 : index
    %0 = vector.load %arg1[%c0, %c0_0, %c0_1] : memref<8x8x128xf32, #tpu.memory_space<vmem>>, vector<8x8x128xf32>
    %1 = vector.shape_cast %0 : vector<8x8x128xf32> to vector<64x128xf32>
    %c0_2 = arith.constant 0 : index
    %c0_3 = arith.constant 0 : index
    %2 = vector.load %arg2[%c0_2, %c0_3] : memref<128x64xf32, #tpu.memory_space<vmem>>, vector<128x64xf32>
    %cst = arith.constant dense<0.000000e+00> : vector<64x64xf32>
    %3 = tpu.matmul %1, %2, %cst {dimension_numbers = #tpu.dot_dimension_numbers<[1], [0], [0], [1], [0, 0, 1, 1], [], []>} : vector<64x128xf32>, vector<128x64xf32>, vector<64x64xf32> -> vector<64x64xf32>
    %c0_4 = arith.constant 0 : index
    %c0_5 = arith.constant 0 : index
    %4 = vector.load %arg3[%c0_4, %c0_5] : memref<1x64xf32, #tpu.memory_space<vmem>>, vector<1x64xf32>
    %5 = vector.broadcast %4 : vector<1x64xf32> to vector<64x64xf32>
    %6 = arith.addf %3, %5 : vector<64x64xf32>
    %7 = math.tanh %6 : vector<64x64xf32>
    %8 = vector.shape_cast %7 : vector<64x64xf32> to vector<8x8x64xf32>
    %c0_6 = arith.constant 0 : index
    %c0_7 = arith.constant 0 : index
    %9 = vector.load %arg4[%c0_6, %c0_7] : memref<1x64xf32, #tpu.memory_space<vmem>>, vector<1x64xf32>
    %10 = vector.shape_cast %9 : vector<1x64xf32> to vector<1x1x64xf32>
    %11 = vector.broadcast %10 : vector<1x1x64xf32> to vector<8x8x64xf32>
    %12 = arith.mulf %8, %11 : vector<8x8x64xf32>
    %cst_8 = arith.constant dense<0.000000e+00> : vector<8x8xf32>
    %13 = vector.multi_reduction <add>, %12, %cst_8 [2] : vector<8x8x64xf32> to vector<8x8xf32>
    %c0_9 = arith.constant 0 : index
    %c0_10 = arith.constant 0 : index
    %14 = memref.load %arg5[%c0_9, %c0_10] : memref<1x1xf32, #tpu.memory_space<smem>>
    %15 = vector.broadcast %14 : f32 to vector<8x8xf32>
    %16 = arith.addf %13, %15 : vector<8x8xf32>
    %cst_11 = arith.constant dense<0xFF800000> : vector<8xf32>
    %17 = vector.multi_reduction <maximumf>, %16, %cst_11 [1] : vector<8x8xf32> to vector<8xf32>
    %18 = vector.shape_cast %17 : vector<8xf32> to vector<8x1xf32>
    %19 = vector.broadcast %18 : vector<8x1xf32> to vector<8x8xf32>
    %20 = arith.subf %16, %19 : vector<8x8xf32>
    %21 = math.exp %20 : vector<8x8xf32>
    %cst_12 = arith.constant dense<0.000000e+00> : vector<8xf32>
    %22 = vector.multi_reduction <add>, %21, %cst_12 [1] : vector<8x8xf32> to vector<8xf32>
    %23 = vector.shape_cast %22 : vector<8xf32> to vector<8x1xf32>
    %24 = tpu.reciprocal %23 : vector<8x1xf32> -> vector<8x1xf32>
    %25 = vector.broadcast %24 : vector<8x1xf32> to vector<8x8xf32>
    %26 = arith.mulf %21, %25 : vector<8x8xf32>
    %27 = vector.shape_cast %26 : vector<8x8xf32> to vector<8x1x8xf32>
    %c0_13 = arith.constant 0 : index
    %c0_14 = arith.constant 0 : index
    %c0_15 = arith.constant 0 : index
    %28 = vector.load %arg1[%c0_13, %c0_14, %c0_15] : memref<8x8x128xf32, #tpu.memory_space<vmem>>, vector<8x8x128xf32>
    "tpu.trace_start"() <{level = 10 : i32, message = "bqs,bsd->bqd"}> : () -> ()
    %cst_16 = arith.constant dense<0.000000e+00> : vector<8x1x128xf32>
    %29 = tpu.matmul %27, %28, %cst_16 {dimension_numbers = #tpu.dot_dimension_numbers<[2], [1], [1], [2], [0, 0, 0, 1, 1, 2], [0], [0]>} : vector<8x1x8xf32>, vector<8x8x128xf32>, vector<8x1x128xf32> -> vector<8x1x128xf32>
    "tpu.trace_stop"() : () -> ()
    %30 = vector.shape_cast %29 : vector<8x1x128xf32> to vector<8x128xf32>
    %c0_17 = arith.constant 0 : index
    %c0_18 = arith.constant 0 : index
    %31 = vector.load %arg6[%c0_17, %c0_18] : memref<8x128xf32, #tpu.memory_space<vmem>>, vector<8x128xf32>
    tpu.vector_store %arg6[%c0_17, %c0_18], %30 {strides = array<i32>} : memref<8x128xf32, #tpu.memory_space<vmem>>, vector<8x128xf32>,
    return
  }
  func.func @transform_0(%arg0: i32) -> (i32, i32, i32) {
    %c0_i32 = arith.constant 0 : i32
    %c0_i32_0 = arith.constant 0 : i32
    %c0_i32_1 = arith.constant 0 : i32
    return %arg0, %c0_i32, %c0_i32_0 : i32, i32, i32
  }
  func.func @transform_1(%arg0: i32) -> (i32, i32) {
    %c0_i32 = arith.constant 0 : i32
    %c0_i32_0 = arith.constant 0 : i32
    %c0_i32_1 = arith.constant 0 : i32
    return %c0_i32, %c0_i32_0 : i32, i32
  }
  func.func @transform_2(%arg0: i32) -> (i32, i32) {
    %c0_i32 = arith.constant 0 : i32
    %c0_i32_0 = arith.constant 0 : i32
    %c0_i32_1 = arith.constant 0 : i32
    return %c0_i32, %c0_i32_0 : i32, i32
  }
  func.func @transform_3(%arg0: i32) -> (i32, i32) {
    %c0_i32 = arith.constant 0 : i32
    %c0_i32_0 = arith.constant 0 : i32
    %c0_i32_1 = arith.constant 0 : i32
    return %c0_i32, %c0_i32_0 : i32, i32
  }
  func.func @transform_4(%arg0: i32) -> (i32, i32) {
    %c0_i32 = arith.constant 0 : i32
    %c0_i32_0 = arith.constant 0 : i32
    %c0_i32_1 = arith.constant 0 : i32
    return %c0_i32, %c0_i32_0 : i32, i32
  }
  func.func @transform_5(%arg0: i32) -> (i32, i32) {
    %c0_i32 = arith.constant 0 : i32
    %c0_i32_0 = arith.constant 0 : i32
    return %arg0, %c0_i32 : i32, i32
  }
}

</mosaic_0001>

<llo_original>
// kernel: tpu_custom_call.1
$region0: #{tpu_custom_call.1}
  #allocation0 [shape = 'u32[]', space=smem, size = 0x4, offset = 0x4, fixed_abs, tag = 'smem constant byte address 0x4 - core index']
  #allocation1 [shape = 'u32[144,128]{1,0:T(1,128)}', space=vmem, size = 0x12000, scoped, tag = 'internal scratch']
  #allocation2 [shape = 'f32[1,1]{1,0:T(1,128)S(6)}', space=smem, size = 0x200, scoped, tag = 'scoped memory for tpu_custom_call.1']
  %s0 = inlined_call_operand.vmem [shape: f32[16,8,128], index: 0, kind: input, shape index: {}]
  %s1 = inlined_call_operand.vmem [shape: f32[128,64], index: 1, kind: input, shape index: {}]
  %s2 = inlined_call_operand.vmem [shape: f32[1,64], index: 2, kind: input, shape index: {}]
  %s3 = inlined_call_operand.vmem [shape: f32[1,64], index: 3, kind: input, shape index: {}]
  %s4 = inlined_call_operand.<no memory space> [shape: f32[1,1], index: 4, kind: input, shape index: {}]
  %s5 = inlined_call_operand.hbm [shape: f32[16,128], index: 5, kind: output, shape index: {}]
  %s6 = sld [smem:[#allocation0]]
  $region53: #{tpu_custom_call.1} parent=0
    _
  %s8 = ssub.s32 1, %s6
  %s9 = scalar_select 0, %s8, %s6
  %10 = sst [smem:[#allocation2]] %s4
  $region1: #{tpu_custom_call.1} parent=0
    #allocation3 [shape = 'u8[8192]{0}', space=vmem, size = 0x2000, scoped, tag = 'output window, operand 0']
    #allocation4 [shape = 's32[2]{0}', space=sflag, size = 0x8, scoped, tag = 'scoped memory for tpu_custom_call.1']
    %11 = vsyncpa [#allocation4], 0
    %s12 = scalar_lea.sflag [#allocation4], 1
    %13 = vsyncpa %s12, 0
    loop: start=0, step=1, limit=4
    $region2: #{tpu_custom_call.1} parent=1 // loop_pre_header
      _
    $region3: #{tpu_custom_call.1} parent=1 // loop_header
      %s15 = sphi 0, %s19
      %p16 = scmp.ge.s32.totalorder %s15, 4
      %s25 = sphi 0, %s27
      %s28 = sphi 0, %s25
      %s29 = sphi 0, %s28
      %s45 = sphi 0, %s29
      %s49 = sphi 0, %s49
      %s51 = sphi 0, %s49
      %s52 = sphi 0, %s51
      %s66 = sphi 0, %s52
      %s70 = sphi 0, %s70
      %s72 = sphi 0, %s70
      %s73 = sphi 0, %s72
      %s87 = sphi 0, %s73
      %s91 = sphi 0, %s91
      %s93 = sphi 0, %s91
      %s94 = sphi 0, %s93
      %s108 = sphi 0, %s94
      %s112 = sphi 0, %s112
      %s114 = sphi 0, %s112
      %s115 = sphi 0, %s114
      %s129 = sphi 0, %s115
      %s135 = sphi 0, %s137
      %s138 = sphi 0, %s135
      %s139 = sphi 0, %s138
      %s155 = sphi 0, %s139
    $region4: #{tpu_custom_call.1} parent=1 // loop_header_branch
      %18 = sbr.rel (%p16) target = $region8
    $region5: #{tpu_custom_call.1} parent=1 // loop_body
      %s20 = ssub.s32 %s15, 1
      %s21 = ssub.s32 %s15, 2
      %s22 = sadd.s32 %s15, 1
      %s23 = ssub.s32 %s15, %s22
      %p24 = scmp.eq.s32.totalorder %s23, 0
      %s26 = sadd.s32 %s25, 1
      %s27 = scalar_select %p24, %s25, %s26
      %p30 = pneg %p24
      %p31 = scmp.eq.s32.totalorder %s15, 1
      %p32 = por %p30, %p31
      %p33 = scmp.ne.s32.totalorder %s25, %s28
      %p34 = scmp.eq.s32.totalorder %s15, 0
      %p35 = por %p33, %p34
      %p36 = scmp.ne.s32.totalorder %s25, %s28
      %p37 = scmp.eq.s32.totalorder %s20, 1
      %p38 = por %p36, %p37
      %p39 = scmp.ne.s32.totalorder %s28, %s29
      %p40 = scmp.eq.s32.totalorder %s20, 0
      %p41 = por %p39, %p40
      %p42 = scmp.ne.s32.totalorder %s28, %s29
      %p43 = scmp.eq.s32.totalorder %s21, 1
      %p44 = por %p42, %p43
      %p46 = scmp.ne.s32.totalorder %s29, %s45
      %p47 = scmp.eq.s32.totalorder %s21, 0
      %p48 = por %p46, %p47
      %s50 = sadd.s32 %s49, 1
      %p53 = scmp.eq.s32.totalorder %s15, 1
      %p54 = scmp.ne.s32.totalorder %s49, %s51
      %p55 = scmp.eq.s32.totalorder %s15, 0
      %p56 = por %p54, %p55
      %p57 = scmp.ne.s32.totalorder %s49, %s51
      %p58 = scmp.eq.s32.totalorder %s20, 1
      %p59 = por %p57, %p58
      %p60 = scmp.ne.s32.totalorder %s51, %s52
      %p61 = scmp.eq.s32.totalorder %s20, 0
      %p62 = por %p60, %p61
      %p63 = scmp.ne.s32.totalorder %s51, %s52
      %p64 = scmp.eq.s32.totalorder %s21, 1
      %p65 = por %p63, %p64
      %p67 = scmp.ne.s32.totalorder %s52, %s66
      %p68 = scmp.eq.s32.totalorder %s21, 0
      %p69 = por %p67, %p68
      %s71 = sadd.s32 %s70, 1
      %p74 = scmp.eq.s32.totalorder %s15, 1
      %p75 = scmp.ne.s32.totalorder %s70, %s72
      %p76 = scmp.eq.s32.totalorder %s15, 0
      %p77 = por %p75, %p76
      %p78 = scmp.ne.s32.totalorder %s70, %s72
      %p79 = scmp.eq.s32.totalorder %s20, 1
      %p80 = por %p78, %p79
      %p81 = scmp.ne.s32.totalorder %s72, %s73
      %p82 = scmp.eq.s32.totalorder %s20, 0
      %p83 = por %p81, %p82
      %p84 = scmp.ne.s32.totalorder %s72, %s73
      %p85 = scmp.eq.s32.totalorder %s21, 1
      %p86 = por %p84, %p85
      %p88 = scmp.ne.s32.totalorder %s73, %s87
      %p89 = scmp.eq.s32.totalorder %s21, 0
      %p90 = por %p88, %p89
      %s92 = sadd.s32 %s91, 1
      %p95 = scmp.eq.s32.totalorder %s15, 1
      %p96 = scmp.ne.s32.totalorder %s91, %s93
      %p97 = scmp.eq.s32.totalorder %s15, 0
      %p98 = por %p96, %p97
      %p99 = scmp.ne.s32.totalorder %s91, %s93
      %p100 = scmp.eq.s32.totalorder %s20, 1
      %p101 = por %p99, %p100
      %p102 = scmp.ne.s32.totalorder %s93, %s94
      %p103 = scmp.eq.s32.totalorder %s20, 0
      %p104 = por %p102, %p103
      %p105 = scmp.ne.s32.totalorder %s93, %s94
      %p106 = scmp.eq.s32.totalorder %s21, 1
      %p107 = por %p105, %p106
      %p109 = scmp.ne.s32.totalorder %s94, %s108
      %p110 = scmp.eq.s32.totalorder %s21, 0
      %p111 = por %p109, %p110
      %s113 = sadd.s32 %s112, 1
      %p116 = scmp.eq.s32.totalorder %s15, 1
      %p117 = scmp.ne.s32.totalorder %s112, %s114
      %p118 = scmp.eq.s32.totalorder %s15, 0
      %p119 = por %p117, %p118
      %p120 = scmp.ne.s32.totalorder %s112, %s114
      %p121 = scmp.eq.s32.totalorder %s20, 1
      %p122 = por %p120, %p121
      %p123 = scmp.ne.s32.totalorder %s114, %s115
      %p124 = scmp.eq.s32.totalorder %s20, 0
      %p125 = por %p123, %p124
      %p126 = scmp.ne.s32.totalorder %s114, %s115
      %p127 = scmp.eq.s32.totalorder %s21, 1
      %p128 = por %p126, %p127
      %p130 = scmp.ne.s32.totalorder %s115, %s129
      %p131 = scmp.eq.s32.totalorder %s21, 0
      %p132 = por %p130, %p131
      %s133 = ssub.s32 %s15, %s22
      %p134 = scmp.eq.s32.totalorder %s133, 0
      %s136 = sadd.s32 %s135, 1
      %s137 = scalar_select %p134, %s135, %s136
      %p140 = pneg %p134
      %p141 = scmp.eq.s32.totalorder %s15, 1
      %p142 = por %p140, %p141
      %p143 = scmp.ne.s32.totalorder %s135, %s138
      %p144 = scmp.eq.s32.totalorder %s15, 0
      %p145 = por %p143, %p144
      %p146 = scmp.ne.s32.totalorder %s135, %s138
      %p147 = scmp.eq.s32.totalorder %s20, 1
      %p148 = por %p146, %p147
      %p149 = scmp.ne.s32.totalorder %s138, %s139
      %p150 = scmp.eq.s32.totalorder %s20, 0
      %p151 = por %p149, %p150
      %p152 = scmp.ne.s32.totalorder %s138, %s139
      %p153 = scmp.eq.s32.totalorder %s21, 1
      %p154 = por %p152, %p153
      %p156 = scmp.ne.s32.totalorder %s139, %s155
      %p157 = scmp.eq.s32.totalorder %s21, 0
      %p158 = por %p156, %p157
      %p159 = scmp.le.s32.totalorder 1, %s15
      %p160 = scmp.lt.s32.totalorder %s15, 3
      %p161 = pnand %p159, %p160
      %p162 = pneg %p161
      // Predicated region
      $region9: #{tpu_custom_call.1} parent=5 // pred_check
        _
      $region10: #{tpu_custom_call.1} parent=5 // pred_check_branch
        %164 = sbr.rel (%p161) target = $region12
      $region11: #{tpu_custom_call.1} parent=5 // pred_region
        %s165 = ssub.s32 %s15, 1
        // Predicated region
        $region13: #{tpu_custom_call.1} parent=11 // pred_check
          %p166 = pneg %p62
        $region14: #{tpu_custom_call.1} parent=11 // pred_check_branch
          %168 = sbr.rel (%p166) target = $region16
        $region15: #{tpu_custom_call.1} parent=11 // pred_region
          _
        $region16: #{tpu_custom_call.1} parent=11 // pred_fallthru
          _
        // Predicated region
        $region17: #{tpu_custom_call.1} parent=11 // pred_check
          %p169 = pneg %p83
        $region18: #{tpu_custom_call.1} parent=11 // pred_check_branch
          %171 = sbr.rel (%p169) target = $region20
        $region19: #{tpu_custom_call.1} parent=11 // pred_region
          _
        $region20: #{tpu_custom_call.1} parent=11 // pred_fallthru
          _
        // Predicated region
        $region21: #{tpu_custom_call.1} parent=11 // pred_check
          %p172 = pneg %p104
        $region22: #{tpu_custom_call.1} parent=11 // pred_check_branch
          %174 = sbr.rel (%p172) target = $region24
        $region23: #{tpu_custom_call.1} parent=11 // pred_region
          _
        $region24: #{tpu_custom_call.1} parent=11 // pred_fallthru
          _
        // Predicated region
        $region25: #{tpu_custom_call.1} parent=11 // pred_check
          %p175 = pneg %p125
        $region26: #{tpu_custom_call.1} parent=11 // pred_check_branch
          %177 = sbr.rel (%p175) target = $region28
        $region27: #{tpu_custom_call.1} parent=11 // pred_region
          _
        $region28: #{tpu_custom_call.1} parent=11 // pred_fallthru
          _
      $region12: #{tpu_custom_call.1} parent=5 // pred_fallthru
        _
      %p178 = scmp.lt.s32.totalorder %s15, 2
      // Predicated region
      $region29: #{tpu_custom_call.1} parent=5 // pred_check
        %p179 = pneg %p178
      $region30: #{tpu_custom_call.1} parent=5 // pred_check_branch
        %181 = sbr.rel (%p179) target = $region32
      $region31: #{tpu_custom_call.1} parent=5 // pred_region
        // Predicated region
        $region33: #{tpu_custom_call.1} parent=31 // pred_check
          %p182 = pneg %p35
        $region34: #{tpu_custom_call.1} parent=31 // pred_check_branch
          %184 = sbr.rel (%p182) target = $region36
        $region35: #{tpu_custom_call.1} parent=31 // pred_region
          %s185 = smul.u32 8, %s15
          %p186 = scmp.lt.s32.totalorder %s185, 15
          %s187 = scalar_select %p186, %s185, 15
          %s188 = smul.addr %s187, 8
          %s189 = scalar_lea.vmem %s0, %s188
          %s190 = smul.u32 8, %s15
        $region36: #{tpu_custom_call.1} parent=31 // pred_fallthru
          _
      $region32: #{tpu_custom_call.1} parent=5 // pred_fallthru
        _
      %p191 = scmp.le.s32.totalorder 1, %s15
      %p192 = scmp.lt.s32.totalorder %s15, 3
      %p193 = pnand %p191, %p192
      %p194 = pneg %p193
      // Predicated region
      $region37: #{tpu_custom_call.1} parent=5 // pred_check
        _
      $region38: #{tpu_custom_call.1} parent=5 // pred_check_branch
        %196 = sbr.rel (%p193) target = $region40
      $region39: #{tpu_custom_call.1} parent=5 // pred_region
        %s197 = ssub.s32 %s15, 1
        %s198 = smul.u32 8, %s20
        %p199 = scmp.lt.s32.totalorder %s198, 15
        %s200 = scalar_select %p199, %s198, 15
        %s201 = smul.addr %s200, 8
        %s202 = scalar_lea.vmem %s0, %s201
        %p203 = pneg %p41
        %p204 = pneg %p38
        %p205 = pneg %p62
        %p206 = pneg %p59
        %p207 = pneg %p83
        %p208 = pneg %p80
        %p209 = pneg %p104
        %p210 = pneg %p101
        %p211 = pneg %p125
        %p212 = pneg %p122
        %p213 = pneg %p151
        %p214 = pneg %p148
        %s215 = sand.u32 %s138, 1
        %s216 = scalar_lea.sflag [#allocation4], %s215
        %s217 = sand.u32 %s138, 1
        %s218 = smul.addr %s217, 8
        %s219 = scalar_lea.vmem [#allocation3], %s218
        %s220 = smul.u32 8, %s20
        %p221 = scmp.lt.s32.totalorder %s220, 15
        %s222 = scalar_select %p221, %s220, 15
        %s223 = smul.addr %s222, 8
        %s224 = scalar_lea.vmem %s0, %s223
        %s225 = smul.u32 8, %s20
        %v226 = vld [vmem:[%s224] sm:$0xff]
        %v227 = vld [vmem:[%s224 + $0x8] sm:$0xff]
        %v228 = vld [vmem:[%s224 + $0x10] sm:$0xff]
        %v229 = vld [vmem:[%s224 + $0x18] sm:$0xff]
        %v230 = vld [vmem:[%s224 + $0x20] sm:$0xff]
        %v231 = vld [vmem:[%s224 + $0x28] sm:$0xff]
        %v232 = vld [vmem:[%s224 + $0x30] sm:$0xff]
        %v233 = vld [vmem:[%s224 + $0x38] sm:$0xff]
        %v234 = vld [vmem:[%s1] sm:$0xff]
        %v235 = vld [vmem:[%s1 + $0x8] sm:$0xff]
        %v236 = vld [vmem:[%s1 + $0x10] sm:$0xff]
        %v237 = vld [vmem:[%s1 + $0x18] sm:$0xff]
        %v238 = vld [vmem:[%s1 + $0x20] sm:$0xff]
        %v239 = vld [vmem:[%s1 + $0x28] sm:$0xff]
        %v240 = vld [vmem:[%s1 + $0x30] sm:$0xff]
        %v241 = vld [vmem:[%s1 + $0x38] sm:$0xff]
        %v242 = vld [vmem:[%s1 + $0x40] sm:$0xff]
        %v243 = vld [vmem:[%s1 + $0x48] sm:$0xff]
        %v244 = vld [vmem:[%s1 + $0x50] sm:$0xff]
        %v245 = vld [vmem:[%s1 + $0x58] sm:$0xff]
        %v246 = vld [vmem:[%s1 + $0x60] sm:$0xff]
        %v247 = vld [vmem:[%s1 + $0x68] sm:$0xff]
        %v248 = vld [vmem:[%s1 + $0x70] sm:$0xff]
        %v249 = vld [vmem:[%s1 + $0x78] sm:$0xff]
        %v250 = vld [vmem:[%s2] sm:$0x1]
        %v252 = vlaneseq
        %v253 = vshrl.u32 %v252, 7
        %v254 = vsub.s32 0, %v253
        %v255 = vrot.slane %v250, %v254
        %257 = vmatprep.subr.mxu0 0.0
        %258 = vmatpush1.msra.mxu0 %v234
        %259 = vmatprep.subr.mxu0 0.0
        %260 = vmatpush1.msra.mxu0 %v235
        %261 = vmatprep.subr.mxu0 0.0
        %262 = vmatpush1.msra.mxu0 %v236
        %263 = vmatprep.subr.mxu0 0.0
        %264 = vmatpush1.msra.mxu0 %v237
        %265 = vmatprep.subr.mxu0 0.0
        %266 = vmatpush1.msra.mxu0 %v238
        %267 = vmatprep.subr.mxu0 0.0
        %268 = vmatpush1.msra.mxu0 %v239
        %269 = vmatprep.subr.mxu0 0.0
        %270 = vmatpush1.msra.mxu0 %v240
        %271 = vmatprep.subr.mxu0 0.0
        %272 = vmatpush1.msra.mxu0 %v241
        %273 = vmatprep.subr.mxu0 0.0
        %274 = vmatpush1.msra.mxu0 %v242
        %275 = vmatprep.subr.mxu0 0.0
        %276 = vmatpush1.msra.mxu0 %v243
        %277 = vmatprep.subr.mxu0 0.0
        %278 = vmatpush1.msra.mxu0 %v244
        %279 = vmatprep.subr.mxu0 0.0
        %280 = vmatpush1.msra.mxu0 %v245
        %281 = vmatprep.subr.mxu0 0.0
        %282 = vmatpush1.msra.mxu0 %v246
        %283 = vmatprep.subr.mxu0 0.0
        %284 = vmatpush1.msra.mxu0 %v247
        %285 = vmatprep.subr.mxu0 0.0
        %286 = vmatpush1.msra.mxu0 %v248
        %287 = vmatprep.subr.mxu0 0.0
        %288 = vmatpush1.msra.mxu0 %v249
        %289 = vmatprep.subr.mxu0 0.0
        %290 = vmatpush1.msra.mxu0 0.0
        %291 = vmatprep.subr.mxu0 0.0
        %292 = vmatpush1.msra.mxu0 0.0
        %293 = vmatprep.subr.mxu0 0.0
        %294 = vmatpush1.msra.mxu0 0.0
        %295 = vmatprep.subr.mxu0 0.0
        %296 = vmatpush1.msra.mxu0 0.0
        %297 = vmatprep.subr.mxu0 0.0
        %298 = vmatpush1.msra.mxu0 0.0
        %299 = vmatprep.subr.mxu0 0.0
        %300 = vmatpush1.msra.mxu0 0.0
        %301 = vmatprep.subr.mxu0 0.0
        %302 = vmatpush1.msra.mxu0 0.0
        %303 = vmatprep.subr.mxu0 0.0
        %304 = vmatpush1.msra.mxu0 0.0
        %305 = vmatprep.subr.mxu0 0.0
        %306 = vmatpush1.msra.mxu0 0.0
        %307 = vmatprep.subr.mxu0 0.0
        %308 = vmatpush1.msra.mxu0 0.0
        %309 = vmatprep.subr.mxu0 0.0
        %310 = vmatpush1.msra.mxu0 0.0
        %311 = vmatprep.subr.mxu0 0.0
        %312 = vmatpush1.msra.mxu0 0.0
        %313 = vmatprep.subr.mxu0 0.0
        %314 = vmatpush1.msra.mxu0 0.0
        %315 = vmatprep.subr.mxu0 0.0
        %316 = vmatpush1.msra.mxu0 0.0
        %317 = vmatprep.subr.mxu0 0.0
        %318 = vmatpush1.msra.mxu0 0.0
        %319 = vmatprep.subr.mxu0 0.0
        %320 = vmatpush1.msra.mxu0 0.0
        %321 = vmatprep.mubr.f32.mxu0 0.0
        %322 = vmatmul.mubr.f32.gmra.mrb[0].mxu0 %v226
        %v323 = vpop.f32.mrb[0].mxu0
        %v324 = vadd.f32 %v255, %v323
        %v325 = vpop.f32.mrb[0].mxu0
        %326 = vmatprep.mubr.f32.mxu0 0.0
        %327 = vmatmul.mubr.f32.gmra.mrb[0].mxu0 %v227
        %v328 = vpop.f32.mrb[0].mxu0
        %v329 = vadd.f32 %v255, %v328
        %v330 = vpop.f32.mrb[0].mxu0
        %331 = vmatprep.mubr.f32.mxu0 0.0
        %332 = vmatmul.mubr.f32.gmra.mrb[0].mxu0 %v228
        %v333 = vpop.f32.mrb[0].mxu0
        %v334 = vadd.f32 %v255, %v333
        %v335 = vpop.f32.mrb[0].mxu0
        %336 = vmatprep.mubr.f32.mxu0 0.0
        %337 = vmatmul.mubr.f32.gmra.mrb[0].mxu0 %v229
        %v338 = vpop.f32.mrb[0].mxu0
        %v339 = vadd.f32 %v255, %v338
        %v340 = vpop.f32.mrb[0].mxu0
        %341 = vmatprep.mubr.f32.mxu0 0.0
        %342 = vmatmul.mubr.f32.gmra.mrb[0].mxu0 %v230
        %v343 = vpop.f32.mrb[0].mxu0
        %v344 = vadd.f32 %v255, %v343
        %v345 = vpop.f32.mrb[0].mxu0
        %346 = vmatprep.mubr.f32.mxu0 0.0
        %347 = vmatmul.mubr.f32.gmra.mrb[0].mxu0 %v231
        %v348 = vpop.f32.mrb[0].mxu0
        %v349 = vadd.f32 %v255, %v348
        %v350 = vpop.f32.mrb[0].mxu0
        %351 = vmatprep.mubr.f32.mxu0 0.0
        %352 = vmatmul.mubr.f32.gmra.mrb[0].mxu0 %v232
        %v353 = vpop.f32.mrb[0].mxu0
        %v354 = vadd.f32 %v255, %v353
        %v355 = vpop.f32.mrb[0].mxu0
        %356 = vmatprep.mubr.f32.mxu0 0.0
        %357 = vmatmul.mubr.f32.gmra.mrb[0].mxu0 %v233
        %v358 = vpop.f32.mrb[0].mxu0
        %v359 = vadd.f32 %v255, %v358
        %v360 = vpop.f32.mrb[0].mxu0
        %361 = vdwg.mxu0
        %v362 = vtanh.pop %v324
        %v363 = vtanh.pop %v329
        %v364 = vtanh.pop %v334
        %v365 = vtanh.pop %v339
        %v366 = vtanh.pop %v344
        %v367 = vtanh.pop %v349
        %v368 = vtanh.pop %v354
        %v369 = vtanh.pop %v359
        %v370 = vld [vmem:[%s3] sm:$0x1]
        %v372 = vlaneseq
        %v373 = vshrl.u32 %v372, 7
        %v374 = vsub.s32 0, %v373
        %v375 = vrot.slane %v370, %v374
        %v377 = vmul.f32 %v362, %v375
        %v378 = vmul.f32 %v363, %v375
        %v379 = vmul.f32 %v364, %v375
        %v380 = vmul.f32 %v365, %v375
        %v381 = vmul.f32 %v366, %v375
        %v382 = vmul.f32 %v367, %v375
        %v383 = vmul.f32 %v368, %v375
        %v384 = vmul.f32 %v369, %v375
        %vm385 = vcmask 523264
        %v386 = vsel %vm385, %v377, 0.0
        %387 = vadd.xlane.f32.xlu0 %v386
        %v388 = vpop.xlane.xlu0 %387
        %v389 = vsel %vm385, %v378, 0.0
        %390 = vadd.xlane.f32.xlu0 %v389
        %v391 = vpop.xlane.xlu0 %390
        %v392 = vsel %vm385, %v379, 0.0
        %393 = vadd.xlane.f32.xlu0 %v392
        %v394 = vpop.xlane.xlu0 %393
        %v395 = vsel %vm385, %v380, 0.0
        %396 = vadd.xlane.f32.xlu0 %v395
        %v397 = vpop.xlane.xlu0 %396
        %v398 = vsel %vm385, %v381, 0.0
        %399 = vadd.xlane.f32.xlu0 %v398
        %v400 = vpop.xlane.xlu0 %399
        %v401 = vsel %vm385, %v382, 0.0
        %402 = vadd.xlane.f32.xlu0 %v401
        %v403 = vpop.xlane.xlu0 %402
        %v404 = vsel %vm385, %v383, 0.0
        %405 = vadd.xlane.f32.xlu0 %v404
        %v406 = vpop.xlane.xlu0 %405
        %v407 = vsel %vm385, %v384, 0.0
        %408 = vadd.xlane.f32.xlu0 %v407
        %v409 = vpop.xlane.xlu0 %408
        %s410 = sld [smem:[#allocation2]]
        %v411 = vstv %s410
        %v412 = vadd.f32 %v388, %v411
        %v413 = vadd.f32 %v391, %v411
        %v414 = vadd.f32 %v394, %v411
        %v415 = vadd.f32 %v397, %v411
        %v416 = vadd.f32 %v400, %v411
        %v417 = vadd.f32 %v403, %v411
        %v418 = vadd.f32 %v406, %v411
        %v419 = vadd.f32 %v409, %v411
        %v428 = vlaneseq
        %v429 = vand.u32 %v428, 127
        %v430 = vlaneseq
        %v431 = vshrl.u32 %v430, 7
        %v432 = vsub.s32 %v429, %v431
        %v433 = vrot.slane %v412, %v432
        %v434 = vlaneseq
        %v435 = vshrl.u32 %v434, 7
        %v436 = vsub.s32 %v429, %v435
        %v437 = vrot.slane %v413, %v436
        %v438 = vlaneseq
        %v439 = vshrl.u32 %v438, 7
        %v440 = vsub.s32 %v429, %v439
        %v441 = vrot.slane %v414, %v440
        %v442 = vlaneseq
        %v443 = vshrl.u32 %v442, 7
        %v444 = vsub.s32 %v429, %v443
        %v445 = vrot.slane %v415, %v444
        %v446 = vlaneseq
        %v447 = vshrl.u32 %v446, 7
        %v448 = vsub.s32 %v429, %v447
        %v449 = vrot.slane %v416, %v448
        %v450 = vlaneseq
        %v451 = vshrl.u32 %v450, 7
        %v452 = vsub.s32 %v429, %v451
        %v453 = vrot.slane %v417, %v452
        %v454 = vlaneseq
        %v455 = vshrl.u32 %v454, 7
        %v456 = vsub.s32 %v429, %v455
        %v457 = vrot.slane %v418, %v456
        %v458 = vlaneseq
        %v459 = vshrl.u32 %v458, 7
        %v460 = vsub.s32 %v429, %v459
        %v461 = vrot.slane %v419, %v460
        %vm462 = vcmask 1041409
        %v463 = vsel %vm462, %v437, %v433
        %vm464 = vcmask 1042434
        %v465 = vsel %vm464, %v441, %v463
        %vm466 = vcmask 1043459
        %v467 = vsel %vm466, %v445, %v465
        %vm468 = vcmask 1044484
        %v469 = vsel %vm468, %v449, %v467
        %vm470 = vcmask 1045509
        %v471 = vsel %vm470, %v453, %v469
        %vm472 = vcmask 1046534
        %v473 = vsel %vm472, %v457, %v471
        %vm474 = vcmask 1047559
        %v475 = vsel %vm474, %v461, %v473
        %vm477 = vcmask 64512
        %v478 = vsel %vm477, %v475, -inf
        %479 = vmax.xlane.f32.xlu0 %v478
        %v480 = vpop.xlane.xlu0 %479
        %v482 = vlaneseq
        %v483 = vshrl.u32 %v482, 7
        %v484 = vsub.s32 0, %v483
        %v485 = vrot.slane %v480, %v484
        %v486 = vlaneseq
        %v487 = vshrl.u32 %v486, 7
        %v488 = vsub.s32 1, %v487
        %v489 = vrot.slane %v480, %v488
        %v490 = vlaneseq
        %v491 = vshrl.u32 %v490, 7
        %v492 = vsub.s32 2, %v491
        %v493 = vrot.slane %v480, %v492
        %v494 = vlaneseq
        %v495 = vshrl.u32 %v494, 7
        %v496 = vsub.s32 3, %v495
        %v497 = vrot.slane %v480, %v496
        %v498 = vlaneseq
        %v499 = vshrl.u32 %v498, 7
        %v500 = vsub.s32 4, %v499
        %v501 = vrot.slane %v480, %v500
        %v502 = vlaneseq
        %v503 = vshrl.u32 %v502, 7
        %v504 = vsub.s32 5, %v503
        %v505 = vrot.slane %v480, %v504
        %v506 = vlaneseq
        %v507 = vshrl.u32 %v506, 7
        %v508 = vsub.s32 6, %v507
        %v509 = vrot.slane %v480, %v508
        %v510 = vlaneseq
        %v511 = vshrl.u32 %v510, 7
        %v512 = vsub.s32 7, %v511
        %v513 = vrot.slane %v480, %v512
        %v522 = vsub.f32 %v412, %v485
        %v523 = vsub.f32 %v413, %v489
        %v524 = vsub.f32 %v414, %v493
        %v525 = vsub.f32 %v415, %v497
        %v526 = vsub.f32 %v416, %v501
        %v527 = vsub.f32 %v417, %v505
        %v528 = vsub.f32 %v418, %v509
        %v529 = vsub.f32 %v419, %v513
        %v530 = vmul.f32 %v522, 1.442695
        %v531 = vpow.pop %v530
        %v532 = vmul.f32 %v523, 1.442695
        %v533 = vpow.pop %v532
        %v534 = vmul.f32 %v524, 1.442695
        %v535 = vpow.pop %v534
        %v536 = vmul.f32 %v525, 1.442695
        %v537 = vpow.pop %v536
        %v538 = vmul.f32 %v526, 1.442695
        %v539 = vpow.pop %v538
        %v540 = vmul.f32 %v527, 1.442695
        %v541 = vpow.pop %v540
        %v542 = vmul.f32 %v528, 1.442695
        %v543 = vpow.pop %v542
        %v544 = vmul.f32 %v529, 1.442695
        %v545 = vpow.pop %v544
        %554 = vset.pattern.permute.xlu0 0
        %555 = vperm.xlu0 %554, %v531
        %v556 = vpop.permute.xlu0 %555
        %557 = vset.pattern.permute.xlu0 0
        %558 = vperm.xlu0 %557, %v533
        %v559 = vpop.permute.xlu0 %558
        %560 = vset.pattern.permute.xlu0 0
        %561 = vperm.xlu0 %560, %v535
        %v562 = vpop.permute.xlu0 %561
        %563 = vset.pattern.permute.xlu0 0
        %564 = vperm.xlu0 %563, %v537
        %v565 = vpop.permute.xlu0 %564
        %566 = vset.pattern.permute.xlu0 0
        %567 = vperm.xlu0 %566, %v539
        %v568 = vpop.permute.xlu0 %567
        %569 = vset.pattern.permute.xlu0 0
        %570 = vperm.xlu0 %569, %v541
        %v571 = vpop.permute.xlu0 %570
        %572 = vset.pattern.permute.xlu0 0
        %573 = vperm.xlu0 %572, %v543
        %v574 = vpop.permute.xlu0 %573
        %575 = vset.pattern.permute.xlu0 0
        %576 = vperm.xlu0 %575, %v545
        %v577 = vpop.permute.xlu0 %576
        %v578 = vlaneseq
        %v579 = vshrl.u32 %v578, 7
        %v580 = vsub.s32 %v429, %v579
        %v581 = vrot.slane %v556, %v580
        %v582 = vlaneseq
        %v583 = vshrl.u32 %v582, 7
        %v584 = vsub.s32 %v429, %v583
        %v585 = vrot.slane %v559, %v584
        %v586 = vlaneseq
        %v587 = vshrl.u32 %v586, 7
        %v588 = vsub.s32 %v429, %v587
        %v589 = vrot.slane %v562, %v588
        %v590 = vlaneseq
        %v591 = vshrl.u32 %v590, 7
        %v592 = vsub.s32 %v429, %v591
        %v593 = vrot.slane %v565, %v592
        %v594 = vlaneseq
        %v595 = vshrl.u32 %v594, 7
        %v596 = vsub.s32 %v429, %v595
        %v597 = vrot.slane %v568, %v596
        %v598 = vlaneseq
        %v599 = vshrl.u32 %v598, 7
        %v600 = vsub.s32 %v429, %v599
        %v601 = vrot.slane %v571, %v600
        %v602 = vlaneseq
        %v603 = vshrl.u32 %v602, 7
        %v604 = vsub.s32 %v429, %v603
        %v605 = vrot.slane %v574, %v604
        %v606 = vlaneseq
        %v607 = vshrl.u32 %v606, 7
        %v608 = vsub.s32 %v429, %v607
        %v609 = vrot.slane %v577, %v608
        %v610 = vsel %vm462, %v585, %v581
        %v611 = vsel %vm464, %v589, %v610
        %v612 = vsel %vm466, %v593, %v611
        %v613 = vsel %vm468, %v597, %v612
        %v614 = vsel %vm470, %v601, %v613
        %v615 = vsel %vm472, %v605, %v614
        %v616 = vsel %vm474, %v609, %v615
        %v618 = vsel %vm477, %v616, 0.0
        %619 = vadd.xlane.f32.xlu0 %v618
        %v620 = vpop.xlane.xlu0 %619
        %v621 = vrcp.pop %v620
        %v623 = vlaneseq
        %v624 = vshrl.u32 %v623, 7
        %v625 = vsub.s32 0, %v624
        %v626 = vrot.slane %v621, %v625
        %v627 = vlaneseq
        %v628 = vshrl.u32 %v627, 7
        %v629 = vsub.s32 1, %v628
        %v630 = vrot.slane %v621, %v629
        %v631 = vlaneseq
        %v632 = vshrl.u32 %v631, 7
        %v633 = vsub.s32 2, %v632
        %v634 = vrot.slane %v621, %v633
        %v635 = vlaneseq
        %v636 = vshrl.u32 %v635, 7
        %v637 = vsub.s32 3, %v636
        %v638 = vrot.slane %v621, %v637
        %v639 = vlaneseq
        %v640 = vshrl.u32 %v639, 7
        %v641 = vsub.s32 4, %v640
        %v642 = vrot.slane %v621, %v641
        %v643 = vlaneseq
        %v644 = vshrl.u32 %v643, 7
        %v645 = vsub.s32 5, %v644
        %v646 = vrot.slane %v621, %v645
        %v647 = vlaneseq
        %v648 = vshrl.u32 %v647, 7
        %v649 = vsub.s32 6, %v648
        %v650 = vrot.slane %v621, %v649
        %v651 = vlaneseq
        %v652 = vshrl.u32 %v651, 7
        %v653 = vsub.s32 7, %v652
        %v654 = vrot.slane %v621, %v653
        %v663 = vmul.f32 %v531, %v626
        %v664 = vmul.f32 %v533, %v630
        %v665 = vmul.f32 %v535, %v634
        %v666 = vmul.f32 %v537, %v638
        %v667 = vmul.f32 %v539, %v642
        %v668 = vmul.f32 %v541, %v646
        %v669 = vmul.f32 %v543, %v650
        %v670 = vmul.f32 %v545, %v654
        %672 = vset.pattern.permute.xlu0 0
        %673 = vperm.xlu0 %672, %v663
        %v674 = vpop.permute.xlu0 %673
        %v675 = vlaneseq
        %v676 = vshrl.u32 %v675, 7
        %v677 = vsub.s32 %v429, %v676
        %v678 = vrot.slane %v674, %v677
        %v679 = vsel %vm477, %v678, 0
        %681 = vmatprep.subr.mxu0 0.0
        %682 = vmatpush1.msra.mxu0 %v226
        %683 = vmatprep.subr.mxu0 0.0
        %684 = vmatpush1.msra.mxu0 0.0
        %685 = vmatprep.subr.mxu0 0.0
        %686 = vmatpush1.msra.mxu0 0.0
        %687 = vmatprep.subr.mxu0 0.0
        %688 = vmatpush1.msra.mxu0 0.0
        %689 = vmatprep.subr.mxu0 0.0
        %690 = vmatpush1.msra.mxu0 0.0
        %691 = vmatprep.subr.mxu0 0.0
        %692 = vmatpush1.msra.mxu0 0.0
        %693 = vmatprep.subr.mxu0 0.0
        %694 = vmatpush1.msra.mxu0 0.0
        %695 = vmatprep.subr.mxu0 0.0
        %696 = vmatpush1.msra.mxu0 0.0
        %697 = vmatprep.subr.mxu0 0.0
        %698 = vmatpush1.msra.mxu0 0.0
        %699 = vmatprep.subr.mxu0 0.0
        %700 = vmatpush1.msra.mxu0 0.0
        %701 = vmatprep.subr.mxu0 0.0
        %702 = vmatpush1.msra.mxu0 0.0
        %703 = vmatprep.subr.mxu0 0.0
        %704 = vmatpush1.msra.mxu0 0.0
        %705 = vmatprep.subr.mxu0 0.0
        %706 = vmatpush1.msra.mxu0 0.0
        %707 = vmatprep.subr.mxu0 0.0
        %708 = vmatpush1.msra.mxu0 0.0
        %709 = vmatprep.subr.mxu0 0.0
        %710 = vmatpush1.msra.mxu0 0.0
        %711 = vmatprep.subr.mxu0 0.0
        %712 = vmatpush1.msra.mxu0 0.0
        %713 = vmatprep.subr.mxu0 0.0
        %714 = vmatpush1.msra.mxu0 0.0
        %715 = vmatprep.subr.mxu0 0.0
        %716 = vmatpush1.msra.mxu0 0.0
        %717 = vmatprep.subr.mxu0 0.0
        %718 = vmatpush1.msra.mxu0 0.0
        %719 = vmatprep.subr.mxu0 0.0
        %720 = vmatpush1.msra.mxu0 0.0
        %721 = vmatprep.subr.mxu0 0.0
        %722 = vmatpush1.msra.mxu0 0.0
        %723 = vmatprep.subr.mxu0 0.0
        %724 = vmatpush1.msra.mxu0 0.0
        %725 = vmatprep.subr.mxu0 0.0
        %726 = vmatpush1.msra.mxu0 0.0
        %727 = vmatprep.subr.mxu0 0.0
        %728 = vmatpush1.msra.mxu0 0.0
        %729 = vmatprep.subr.mxu0 0.0
        %730 = vmatpush1.msra.mxu0 0.0
        %731 = vmatprep.subr.mxu0 0.0
        %732 = vmatpush1.msra.mxu0 0.0
        %733 = vmatprep.subr.mxu0 0.0
        %734 = vmatpush1.msra.mxu0 0.0
        %735 = vmatprep.subr.mxu0 0.0
        %736 = vmatpush1.msra.mxu0 0.0
        %737 = vmatprep.subr.mxu0 0.0
        %738 = vmatpush1.msra.mxu0 0.0
        %739 = vmatprep.subr.mxu0 0.0
        %740 = vmatpush1.msra.mxu0 0.0
        %741 = vmatprep.subr.mxu0 0.0
        %742 = vmatpush1.msra.mxu0 0.0
        %743 = vmatprep.subr.mxu0 0.0
        %744 = vmatpush1.msra.mxu0 0.0
        %745 = vmatprep.mubr.f32.mxu0 0.0
        %746 = vmatmul.mubr.f32.gmra.mrb[0].mxu0 %v679
        %v747 = vpop.f32.mrb[0].mxu0
        %v748 = vadd.f32 0.0, %v747
        %v749 = vpop.f32.mrb[0].mxu0
        %750 = vdwg.mxu0
        %752 = vset.pattern.permute.xlu0 0
        %753 = vperm.xlu0 %752, %v664
        %v754 = vpop.permute.xlu0 %753
        %v755 = vlaneseq
        %v756 = vshrl.u32 %v755, 7
        %v757 = vsub.s32 %v429, %v756
        %v758 = vrot.slane %v754, %v757
        %v759 = vsel %vm477, %v758, 0
        %761 = vmatprep.subr.mxu0 0.0
        %762 = vmatpush1.msra.mxu0 %v227
        %763 = vmatprep.subr.mxu0 0.0
        %764 = vmatpush1.msra.mxu0 0.0
        %765 = vmatprep.subr.mxu0 0.0
        %766 = vmatpush1.msra.mxu0 0.0
        %767 = vmatprep.subr.mxu0 0.0
        %768 = vmatpush1.msra.mxu0 0.0
        %769 = vmatprep.subr.mxu0 0.0
        %770 = vmatpush1.msra.mxu0 0.0
        %771 = vmatprep.subr.mxu0 0.0
        %772 = vmatpush1.msra.mxu0 0.0
        %773 = vmatprep.subr.mxu0 0.0
        %774 = vmatpush1.msra.mxu0 0.0
        %775 = vmatprep.subr.mxu0 0.0
        %776 = vmatpush1.msra.mxu0 0.0
        %777 = vmatprep.subr.mxu0 0.0
        %778 = vmatpush1.msra.mxu0 0.0
        %779 = vmatprep.subr.mxu0 0.0
        %780 = vmatpush1.msra.mxu0 0.0
        %781 = vmatprep.subr.mxu0 0.0
        %782 = vmatpush1.msra.mxu0 0.0
        %783 = vmatprep.subr.mxu0 0.0
        %784 = vmatpush1.msra.mxu0 0.0
        %785 = vmatprep.subr.mxu0 0.0
        %786 = vmatpush1.msra.mxu0 0.0
        %787 = vmatprep.subr.mxu0 0.0
        %788 = vmatpush1.msra.mxu0 0.0
        %789 = vmatprep.subr.mxu0 0.0
        %790 = vmatpush1.msra.mxu0 0.0
        %791 = vmatprep.subr.mxu0 0.0
        %792 = vmatpush1.msra.mxu0 0.0
        %793 = vmatprep.subr.mxu0 0.0
        %794 = vmatpush1.msra.mxu0 0.0
        %795 = vmatprep.subr.mxu0 0.0
        %796 = vmatpush1.msra.mxu0 0.0
        %797 = vmatprep.subr.mxu0 0.0
        %798 = vmatpush1.msra.mxu0 0.0
        %799 = vmatprep.subr.mxu0 0.0
        %800 = vmatpush1.msra.mxu0 0.0
        %801 = vmatprep.subr.mxu0 0.0
        %802 = vmatpush1.msra.mxu0 0.0
        %803 = vmatprep.subr.mxu0 0.0
        %804 = vmatpush1.msra.mxu0 0.0
        %805 = vmatprep.subr.mxu0 0.0
        %806 = vmatpush1.msra.mxu0 0.0
        %807 = vmatprep.subr.mxu0 0.0
        %808 = vmatpush1.msra.mxu0 0.0
        %809 = vmatprep.subr.mxu0 0.0
        %810 = vmatpush1.msra.mxu0 0.0
        %811 = vmatprep.subr.mxu0 0.0
        %812 = vmatpush1.msra.mxu0 0.0
        %813 = vmatprep.subr.mxu0 0.0
        %814 = vmatpush1.msra.mxu0 0.0
        %815 = vmatprep.subr.mxu0 0.0
        %816 = vmatpush1.msra.mxu0 0.0
        %817 = vmatprep.subr.mxu0 0.0
        %818 = vmatpush1.msra.mxu0 0.0
        %819 = vmatprep.subr.mxu0 0.0
        %820 = vmatpush1.msra.mxu0 0.0
        %821 = vmatprep.subr.mxu0 0.0
        %822 = vmatpush1.msra.mxu0 0.0
        %823 = vmatprep.subr.mxu0 0.0
        %824 = vmatpush1.msra.mxu0 0.0
        %825 = vmatprep.mubr.f32.mxu0 0.0
        %826 = vmatmul.mubr.f32.gmra.mrb[0].mxu0 %v759
        %v827 = vpop.f32.mrb[0].mxu0
        %v828 = vadd.f32 0.0, %v827
        %v829 = vpop.f32.mrb[0].mxu0
        %830 = vdwg.mxu0
        %832 = vset.pattern.permute.xlu0 0
        %833 = vperm.xlu0 %832, %v665
        %v834 = vpop.permute.xlu0 %833
        %v835 = vlaneseq
        %v836 = vshrl.u32 %v835, 7
        %v837 = vsub.s32 %v429, %v836
        %v838 = vrot.slane %v834, %v837
        %v839 = vsel %vm477, %v838, 0
        %841 = vmatprep.subr.mxu0 0.0
        %842 = vmatpush1.msra.mxu0 %v228
        %843 = vmatprep.subr.mxu0 0.0
        %844 = vmatpush1.msra.mxu0 0.0
        %845 = vmatprep.subr.mxu0 0.0
        %846 = vmatpush1.msra.mxu0 0.0
        %847 = vmatprep.subr.mxu0 0.0
        %848 = vmatpush1.msra.mxu0 0.0
        %849 = vmatprep.subr.mxu0 0.0
        %850 = vmatpush1.msra.mxu0 0.0
        %851 = vmatprep.subr.mxu0 0.0
        %852 = vmatpush1.msra.mxu0 0.0
        %853 = vmatprep.subr.mxu0 0.0
        %854 = vmatpush1.msra.mxu0 0.0
        %855 = vmatprep.subr.mxu0 0.0
        %856 = vmatpush1.msra.mxu0 0.0
        %857 = vmatprep.subr.mxu0 0.0
        %858 = vmatpush1.msra.mxu0 0.0
        %859 = vmatprep.subr.mxu0 0.0
        %860 = vmatpush1.msra.mxu0 0.0
        %861 = vmatprep.subr.mxu0 0.0
        %862 = vmatpush1.msra.mxu0 0.0
        %863 = vmatprep.subr.mxu0 0.0
        %864 = vmatpush1.msra.mxu0 0.0
        %865 = vmatprep.subr.mxu0 0.0
        %866 = vmatpush1.msra.mxu0 0.0
        %867 = vmatprep.subr.mxu0 0.0
        %868 = vmatpush1.msra.mxu0 0.0
        %869 = vmatprep.subr.mxu0 0.0
        %870 = vmatpush1.msra.mxu0 0.0
        %871 = vmatprep.subr.mxu0 0.0
        %872 = vmatpush1.msra.mxu0 0.0
        %873 = vmatprep.subr.mxu0 0.0
        %874 = vmatpush1.msra.mxu0 0.0
        %875 = vmatprep.subr.mxu0 0.0
        %876 = vmatpush1.msra.mxu0 0.0
        %877 = vmatprep.subr.mxu0 0.0
        %878 = vmatpush1.msra.mxu0 0.0
        %879 = vmatprep.subr.mxu0 0.0
        %880 = vmatpush1.msra.mxu0 0.0
        %881 = vmatprep.subr.mxu0 0.0
        %882 = vmatpush1.msra.mxu0 0.0
        %883 = vmatprep.subr.mxu0 0.0
        %884 = vmatpush1.msra.mxu0 0.0
        %885 = vmatprep.subr.mxu0 0.0
        %886 = vmatpush1.msra.mxu0 0.0
        %887 = vmatprep.subr.mxu0 0.0
        %888 = vmatpush1.msra.mxu0 0.0
        %889 = vmatprep.subr.mxu0 0.0
        %890 = vmatpush1.msra.mxu0 0.0
        %891 = vmatprep.subr.mxu0 0.0
        %892 = vmatpush1.msra.mxu0 0.0
        %893 = vmatprep.subr.mxu0 0.0
        %894 = vmatpush1.msra.mxu0 0.0
        %895 = vmatprep.subr.mxu0 0.0
        %896 = vmatpush1.msra.mxu0 0.0
        %897 = vmatprep.subr.mxu0 0.0
        %898 = vmatpush1.msra.mxu0 0.0
        %899 = vmatprep.subr.mxu0 0.0
        %900 = vmatpush1.msra.mxu0 0.0
        %901 = vmatprep.subr.mxu0 0.0
        %902 = vmatpush1.msra.mxu0 0.0
        %903 = vmatprep.subr.mxu0 0.0
        %904 = vmatpush1.msra.mxu0 0.0
        %905 = vmatprep.mubr.f32.mxu0 0.0
        %906 = vmatmul.mubr.f32.gmra.mrb[0].mxu0 %v839
        %v907 = vpop.f32.mrb[0].mxu0
        %v908 = vadd.f32 0.0, %v907
        %v909 = vpop.f32.mrb[0].mxu0
        %910 = vdwg.mxu0
        %912 = vset.pattern.permute.xlu0 0
        %913 = vperm.xlu0 %912, %v666
        %v914 = vpop.permute.xlu0 %913
        %v915 = vlaneseq
        %v916 = vshrl.u32 %v915, 7
        %v917 = vsub.s32 %v429, %v916
        %v918 = vrot.slane %v914, %v917
        %v919 = vsel %vm477, %v918, 0
        %921 = vmatprep.subr.mxu0 0.0
        %922 = vmatpush1.msra.mxu0 %v229
        %923 = vmatprep.subr.mxu0 0.0
        %924 = vmatpush1.msra.mxu0 0.0
        %925 = vmatprep.subr.mxu0 0.0
        %926 = vmatpush1.msra.mxu0 0.0
        %927 = vmatprep.subr.mxu0 0.0
        %928 = vmatpush1.msra.mxu0 0.0
        %929 = vmatprep.subr.mxu0 0.0
        %930 = vmatpush1.msra.mxu0 0.0
        %931 = vmatprep.subr.mxu0 0.0
        %932 = vmatpush1.msra.mxu0 0.0
        %933 = vmatprep.subr.mxu0 0.0
        %934 = vmatpush1.msra.mxu0 0.0
        %935 = vmatprep.subr.mxu0 0.0
        %936 = vmatpush1.msra.mxu0 0.0
        %937 = vmatprep.subr.mxu0 0.0
        %938 = vmatpush1.msra.mxu0 0.0
        %939 = vmatprep.subr.mxu0 0.0
        %940 = vmatpush1.msra.mxu0 0.0
        %941 = vmatprep.subr.mxu0 0.0
        %942 = vmatpush1.msra.mxu0 0.0
        %943 = vmatprep.subr.mxu0 0.0
        %944 = vmatpush1.msra.mxu0 0.0
        %945 = vmatprep.subr.mxu0 0.0
        %946 = vmatpush1.msra.mxu0 0.0
        %947 = vmatprep.subr.mxu0 0.0
        %948 = vmatpush1.msra.mxu0 0.0
        %949 = vmatprep.subr.mxu0 0.0
        %950 = vmatpush1.msra.mxu0 0.0
        %951 = vmatprep.subr.mxu0 0.0
        %952 = vmatpush1.msra.mxu0 0.0
        %953 = vmatprep.subr.mxu0 0.0
        %954 = vmatpush1.msra.mxu0 0.0
        %955 = vmatprep.subr.mxu0 0.0
        %956 = vmatpush1.msra.mxu0 0.0
        %957 = vmatprep.subr.mxu0 0.0
        %958 = vmatpush1.msra.mxu0 0.0
        %959 = vmatprep.subr.mxu0 0.0
        %960 = vmatpush1.msra.mxu0 0.0
        %961 = vmatprep.subr.mxu0 0.0
        %962 = vmatpush1.msra.mxu0 0.0
        %963 = vmatprep.subr.mxu0 0.0
        %964 = vmatpush1.msra.mxu0 0.0
        %965 = vmatprep.subr.mxu0 0.0
        %966 = vmatpush1.msra.mxu0 0.0
        %967 = vmatprep.subr.mxu0 0.0
        %968 = vmatpush1.msra.mxu0 0.0
        %969 = vmatprep.subr.mxu0 0.0
        %970 = vmatpush1.msra.mxu0 0.0
        %971 = vmatprep.subr.mxu0 0.0
        %972 = vmatpush1.msra.mxu0 0.0
        %973 = vmatprep.subr.mxu0 0.0
        %974 = vmatpush1.msra.mxu0 0.0
        %975 = vmatprep.subr.mxu0 0.0
        %976 = vmatpush1.msra.mxu0 0.0
        %977 = vmatprep.subr.mxu0 0.0
        %978 = vmatpush1.msra.mxu0 0.0
        %979 = vmatprep.subr.mxu0 0.0
        %980 = vmatpush1.msra.mxu0 0.0
        %981 = vmatprep.subr.mxu0 0.0
        %982 = vmatpush1.msra.mxu0 0.0
        %983 = vmatprep.subr.mxu0 0.0
        %984 = vmatpush1.msra.mxu0 0.0
        %985 = vmatprep.mubr.f32.mxu0 0.0
        %986 = vmatmul.mubr.f32.gmra.mrb[0].mxu0 %v919
        %v987 = vpop.f32.mrb[0].mxu0
        %v988 = vadd.f32 0.0, %v987
        %v989 = vpop.f32.mrb[0].mxu0
        %990 = vdwg.mxu0
        %992 = vset.pattern.permute.xlu0 0
        %993 = vperm.xlu0 %992, %v667
        %v994 = vpop.permute.xlu0 %993
        %v995 = vlaneseq
        %v996 = vshrl.u32 %v995, 7
        %v997 = vsub.s32 %v429, %v996
        %v998 = vrot.slane %v994, %v997
        %v999 = vsel %vm477, %v998, 0
        %1001 = vmatprep.subr.mxu0 0.0
        %1002 = vmatpush1.msra.mxu0 %v230
        %1003 = vmatprep.subr.mxu0 0.0
        %1004 = vmatpush1.msra.mxu0 0.0
        %1005 = vmatprep.subr.mxu0 0.0
        %1006 = vmatpush1.msra.mxu0 0.0
        %1007 = vmatprep.subr.mxu0 0.0
        %1008 = vmatpush1.msra.mxu0 0.0
        %1009 = vmatprep.subr.mxu0 0.0
        %1010 = vmatpush1.msra.mxu0 0.0
        %1011 = vmatprep.subr.mxu0 0.0
        %1012 = vmatpush1.msra.mxu0 0.0
        %1013 = vmatprep.subr.mxu0 0.0
        %1014 = vmatpush1.msra.mxu0 0.0
        %1015 = vmatprep.subr.mxu0 0.0
        %1016 = vmatpush1.msra.mxu0 0.0
        %1017 = vmatprep.subr.mxu0 0.0
        %1018 = vmatpush1.msra.mxu0 0.0
        %1019 = vmatprep.subr.mxu0 0.0
        %1020 = vmatpush1.msra.mxu0 0.0
        %1021 = vmatprep.subr.mxu0 0.0
        %1022 = vmatpush1.msra.mxu0 0.0
        %1023 = vmatprep.subr.mxu0 0.0
        %1024 = vmatpush1.msra.mxu0 0.0
        %1025 = vmatprep.subr.mxu0 0.0
        %1026 = vmatpush1.msra.mxu0 0.0
        %1027 = vmatprep.subr.mxu0 0.0
        %1028 = vmatpush1.msra.mxu0 0.0
        %1029 = vmatprep.subr.mxu0 0.0
        %1030 = vmatpush1.msra.mxu0 0.0
        %1031 = vmatprep.subr.mxu0 0.0
        %1032 = vmatpush1.msra.mxu0 0.0
        %1033 = vmatprep.subr.mxu0 0.0
        %1034 = vmatpush1.msra.mxu0 0.0
        %1035 = vmatprep.subr.mxu0 0.0
        %1036 = vmatpush1.msra.mxu0 0.0
        %1037 = vmatprep.subr.mxu0 0.0
        %1038 = vmatpush1.msra.mxu0 0.0
        %1039 = vmatprep.subr.mxu0 0.0
        %1040 = vmatpush1.msra.mxu0 0.0
        %1041 = vmatprep.subr.mxu0 0.0
        %1042 = vmatpush1.msra.mxu0 0.0
        %1043 = vmatprep.subr.mxu0 0.0
        %1044 = vmatpush1.msra.mxu0 0.0
        %1045 = vmatprep.subr.mxu0 0.0
        %1046 = vmatpush1.msra.mxu0 0.0
        %1047 = vmatprep.subr.mxu0 0.0
        %1048 = vmatpush1.msra.mxu0 0.0
        %1049 = vmatprep.subr.mxu0 0.0
        %1050 = vmatpush1.msra.mxu0 0.0
        %1051 = vmatprep.subr.mxu0 0.0
        %1052 = vmatpush1.msra.mxu0 0.0
        %1053 = vmatprep.subr.mxu0 0.0
        %1054 = vmatpush1.msra.mxu0 0.0
        %1055 = vmatprep.subr.mxu0 0.0
        %1056 = vmatpush1.msra.mxu0 0.0
        %1057 = vmatprep.subr.mxu0 0.0
        %1058 = vmatpush1.msra.mxu0 0.0
        %1059 = vmatprep.subr.mxu0 0.0
        %1060 = vmatpush1.msra.mxu0 0.0
        %1061 = vmatprep.subr.mxu0 0.0
        %1062 = vmatpush1.msra.mxu0 0.0
        %1063 = vmatprep.subr.mxu0 0.0
        %1064 = vmatpush1.msra.mxu0 0.0
        %1065 = vmatprep.mubr.f32.mxu0 0.0
        %1066 = vmatmul.mubr.f32.gmra.mrb[0].mxu0 %v999
        %v1067 = vpop.f32.mrb[0].mxu0
        %v1068 = vadd.f32 0.0, %v1067
        %v1069 = vpop.f32.mrb[0].mxu0
        %1070 = vdwg.mxu0
        %1072 = vset.pattern.permute.xlu0 0
        %1073 = vperm.xlu0 %1072, %v668
        %v1074 = vpop.permute.xlu0 %1073
        %v1075 = vlaneseq
        %v1076 = vshrl.u32 %v1075, 7
        %v1077 = vsub.s32 %v429, %v1076
        %v1078 = vrot.slane %v1074, %v1077
        %v1079 = vsel %vm477, %v1078, 0
        %1081 = vmatprep.subr.mxu0 0.0
        %1082 = vmatpush1.msra.mxu0 %v231
        %1083 = vmatprep.subr.mxu0 0.0
        %1084 = vmatpush1.msra.mxu0 0.0
        %1085 = vmatprep.subr.mxu0 0.0
        %1086 = vmatpush1.msra.mxu0 0.0
        %1087 = vmatprep.subr.mxu0 0.0
        %1088 = vmatpush1.msra.mxu0 0.0
        %1089 = vmatprep.subr.mxu0 0.0
        %1090 = vmatpush1.msra.mxu0 0.0
        %1091 = vmatprep.subr.mxu0 0.0
        %1092 = vmatpush1.msra.mxu0 0.0
        %1093 = vmatprep.subr.mxu0 0.0
        %1094 = vmatpush1.msra.mxu0 0.0
        %1095 = vmatprep.subr.mxu0 0.0
        %1096 = vmatpush1.msra.mxu0 0.0
        %1097 = vmatprep.subr.mxu0 0.0
        %1098 = vmatpush1.msra.mxu0 0.0
        %1099 = vmatprep.subr.mxu0 0.0
        %1100 = vmatpush1.msra.mxu0 0.0
        %1101 = vmatprep.subr.mxu0 0.0
        %1102 = vmatpush1.msra.mxu0 0.0
        %1103 = vmatprep.subr.mxu0 0.0
        %1104 = vmatpush1.msra.mxu0 0.0
        %1105 = vmatprep.subr.mxu0 0.0
        %1106 = vmatpush1.msra.mxu0 0.0
        %1107 = vmatprep.subr.mxu0 0.0
        %1108 = vmatpush1.msra.mxu0 0.0
        %1109 = vmatprep.subr.mxu0 0.0
        %1110 = vmatpush1.msra.mxu0 0.0
        %1111 = vmatprep.subr.mxu0 0.0
        %1112 = vmatpush1.msra.mxu0 0.0
        %1113 = vmatprep.subr.mxu0 0.0
        %1114 = vmatpush1.msra.mxu0 0.0
        %1115 = vmatprep.subr.mxu0 0.0
        %1116 = vmatpush1.msra.mxu0 0.0
        %1117 = vmatprep.subr.mxu0 0.0
        %1118 = vmatpush1.msra.mxu0 0.0
        %1119 = vmatprep.subr.mxu0 0.0
        %1120 = vmatpush1.msra.mxu0 0.0
        %1121 = vmatprep.subr.mxu0 0.0
        %1122 = vmatpush1.msra.mxu0 0.0
        %1123 = vmatprep.subr.mxu0 0.0
        %1124 = vmatpush1.msra.mxu0 0.0
        %1125 = vmatprep.subr.mxu0 0.0
        %1126 = vmatpush1.msra.mxu0 0.0
        %1127 = vmatprep.subr.mxu0 0.0
        %1128 = vmatpush1.msra.mxu0 0.0
        %1129 = vmatprep.subr.mxu0 0.0
        %1130 = vmatpush1.msra.mxu0 0.0
        %1131 = vmatprep.subr.mxu0 0.0
        %1132 = vmatpush1.msra.mxu0 0.0
        %1133 = vmatprep.subr.mxu0 0.0
        %1134 = vmatpush1.msra.mxu0 0.0
        %1135 = vmatprep.subr.mxu0 0.0
        %1136 = vmatpush1.msra.mxu0 0.0
        %1137 = vmatprep.subr.mxu0 0.0
        %1138 = vmatpush1.msra.mxu0 0.0
        %1139 = vmatprep.subr.mxu0 0.0
        %1140 = vmatpush1.msra.mxu0 0.0
        %1141 = vmatprep.subr.mxu0 0.0
        %1142 = vmatpush1.msra.mxu0 0.0
        %1143 = vmatprep.subr.mxu0 0.0
        %1144 = vmatpush1.msra.mxu0 0.0
        %1145 = vmatprep.mubr.f32.mxu0 0.0
        %1146 = vmatmul.mubr.f32.gmra.mrb[0].mxu0 %v1079
        %v1147 = vpop.f32.mrb[0].mxu0
        %v1148 = vadd.f32 0.0, %v1147
        %v1149 = vpop.f32.mrb[0].mxu0
        %1150 = vdwg.mxu0
        %1152 = vset.pattern.permute.xlu0 0
        %1153 = vperm.xlu0 %1152, %v669
        %v1154 = vpop.permute.xlu0 %1153
        %v1155 = vlaneseq
        %v1156 = vshrl.u32 %v1155, 7
        %v1157 = vsub.s32 %v429, %v1156
        %v1158 = vrot.slane %v1154, %v1157
        %v1159 = vsel %vm477, %v1158, 0
        %1161 = vmatprep.subr.mxu0 0.0
        %1162 = vmatpush1.msra.mxu0 %v232
        %1163 = vmatprep.subr.mxu0 0.0
        %1164 = vmatpush1.msra.mxu0 0.0
        %1165 = vmatprep.subr.mxu0 0.0
        %1166 = vmatpush1.msra.mxu0 0.0
        %1167 = vmatprep.subr.mxu0 0.0
        %1168 = vmatpush1.msra.mxu0 0.0
        %1169 = vmatprep.subr.mxu0 0.0
        %1170 = vmatpush1.msra.mxu0 0.0
        %1171 = vmatprep.subr.mxu0 0.0
        %1172 = vmatpush1.msra.mxu0 0.0
        %1173 = vmatprep.subr.mxu0 0.0
        %1174 = vmatpush1.msra.mxu0 0.0
        %1175 = vmatprep.subr.mxu0 0.0
        %1176 = vmatpush1.msra.mxu0 0.0
        %1177 = vmatprep.subr.mxu0 0.0
        %1178 = vmatpush1.msra.mxu0 0.0
        %1179 = vmatprep.subr.mxu0 0.0
        %1180 = vmatpush1.msra.mxu0 0.0
        %1181 = vmatprep.subr.mxu0 0.0
        %1182 = vmatpush1.msra.mxu0 0.0
        %1183 = vmatprep.subr.mxu0 0.0
        %1184 = vmatpush1.msra.mxu0 0.0
        %1185 = vmatprep.subr.mxu0 0.0
        %1186 = vmatpush1.msra.mxu0 0.0
        %1187 = vmatprep.subr.mxu0 0.0
        %1188 = vmatpush1.msra.mxu0 0.0
        %1189 = vmatprep.subr.mxu0 0.0
        %1190 = vmatpush1.msra.mxu0 0.0
        %1191 = vmatprep.subr.mxu0 0.0
        %1192 = vmatpush1.msra.mxu0 0.0
        %1193 = vmatprep.subr.mxu0 0.0
        %1194 = vmatpush1.msra.mxu0 0.0
        %1195 = vmatprep.subr.mxu0 0.0
        %1196 = vmatpush1.msra.mxu0 0.0
        %1197 = vmatprep.subr.mxu0 0.0
        %1198 = vmatpush1.msra.mxu0 0.0
        %1199 = vmatprep.subr.mxu0 0.0
        %1200 = vmatpush1.msra.mxu0 0.0
        %1201 = vmatprep.subr.mxu0 0.0
        %1202 = vmatpush1.msra.mxu0 0.0
        %1203 = vmatprep.subr.mxu0 0.0
        %1204 = vmatpush1.msra.mxu0 0.0
        %1205 = vmatprep.subr.mxu0 0.0
        %1206 = vmatpush1.msra.mxu0 0.0
        %1207 = vmatprep.subr.mxu0 0.0
        %1208 = vmatpush1.msra.mxu0 0.0
        %1209 = vmatprep.subr.mxu0 0.0
        %1210 = vmatpush1.msra.mxu0 0.0
        %1211 = vmatprep.subr.mxu0 0.0
        %1212 = vmatpush1.msra.mxu0 0.0
        %1213 = vmatprep.subr.mxu0 0.0
        %1214 = vmatpush1.msra.mxu0 0.0
        %1215 = vmatprep.subr.mxu0 0.0
        %1216 = vmatpush1.msra.mxu0 0.0
        %1217 = vmatprep.subr.mxu0 0.0
        %1218 = vmatpush1.msra.mxu0 0.0
        %1219 = vmatprep.subr.mxu0 0.0
        %1220 = vmatpush1.msra.mxu0 0.0
        %1221 = vmatprep.subr.mxu0 0.0
        %1222 = vmatpush1.msra.mxu0 0.0
        %1223 = vmatprep.subr.mxu0 0.0
        %1224 = vmatpush1.msra.mxu0 0.0
        %1225 = vmatprep.mubr.f32.mxu0 0.0
        %1226 = vmatmul.mubr.f32.gmra.mrb[0].mxu0 %v1159
        %v1227 = vpop.f32.mrb[0].mxu0
        %v1228 = vadd.f32 0.0, %v1227
        %v1229 = vpop.f32.mrb[0].mxu0
        %1230 = vdwg.mxu0
        %1232 = vset.pattern.permute.xlu0 0
        %1233 = vperm.xlu0 %1232, %v670
        %v1234 = vpop.permute.xlu0 %1233
        %v1235 = vlaneseq
        %v1236 = vshrl.u32 %v1235, 7
        %v1237 = vsub.s32 %v429, %v1236
        %v1238 = vrot.slane %v1234, %v1237
        %v1239 = vsel %vm477, %v1238, 0
        %1241 = vmatprep.subr.mxu0 0.0
        %1242 = vmatpush1.msra.mxu0 %v233
        %1243 = vmatprep.subr.mxu0 0.0
        %1244 = vmatpush1.msra.mxu0 0.0
        %1245 = vmatprep.subr.mxu0 0.0
        %1246 = vmatpush1.msra.mxu0 0.0
        %1247 = vmatprep.subr.mxu0 0.0
        %1248 = vmatpush1.msra.mxu0 0.0
        %1249 = vmatprep.subr.mxu0 0.0
        %1250 = vmatpush1.msra.mxu0 0.0
        %1251 = vmatprep.subr.mxu0 0.0
        %1252 = vmatpush1.msra.mxu0 0.0
        %1253 = vmatprep.subr.mxu0 0.0
        %1254 = vmatpush1.msra.mxu0 0.0
        %1255 = vmatprep.subr.mxu0 0.0
        %1256 = vmatpush1.msra.mxu0 0.0
        %1257 = vmatprep.subr.mxu0 0.0
        %1258 = vmatpush1.msra.mxu0 0.0
        %1259 = vmatprep.subr.mxu0 0.0
        %1260 = vmatpush1.msra.mxu0 0.0
        %1261 = vmatprep.subr.mxu0 0.0
        %1262 = vmatpush1.msra.mxu0 0.0
        %1263 = vmatprep.subr.mxu0 0.0
        %1264 = vmatpush1.msra.mxu0 0.0
        %1265 = vmatprep.subr.mxu0 0.0
        %1266 = vmatpush1.msra.mxu0 0.0
        %1267 = vmatprep.subr.mxu0 0.0
        %1268 = vmatpush1.msra.mxu0 0.0
        %1269 = vmatprep.subr.mxu0 0.0
        %1270 = vmatpush1.msra.mxu0 0.0
        %1271 = vmatprep.subr.mxu0 0.0
        %1272 = vmatpush1.msra.mxu0 0.0
        %1273 = vmatprep.subr.mxu0 0.0
        %1274 = vmatpush1.msra.mxu0 0.0
        %1275 = vmatprep.subr.mxu0 0.0
        %1276 = vmatpush1.msra.mxu0 0.0
        %1277 = vmatprep.subr.mxu0 0.0
        %1278 = vmatpush1.msra.mxu0 0.0
        %1279 = vmatprep.subr.mxu0 0.0
        %1280 = vmatpush1.msra.mxu0 0.0
        %1281 = vmatprep.subr.mxu0 0.0
        %1282 = vmatpush1.msra.mxu0 0.0
        %1283 = vmatprep.subr.mxu0 0.0
        %1284 = vmatpush1.msra.mxu0 0.0
        %1285 = vmatprep.subr.mxu0 0.0
        %1286 = vmatpush1.msra.mxu0 0.0
        %1287 = vmatprep.subr.mxu0 0.0
        %1288 = vmatpush1.msra.mxu0 0.0
        %1289 = vmatprep.subr.mxu0 0.0
        %1290 = vmatpush1.msra.mxu0 0.0
        %1291 = vmatprep.subr.mxu0 0.0
        %1292 = vmatpush1.msra.mxu0 0.0
        %1293 = vmatprep.subr.mxu0 0.0
        %1294 = vmatpush1.msra.mxu0 0.0
        %1295 = vmatprep.subr.mxu0 0.0
        %1296 = vmatpush1.msra.mxu0 0.0
        %1297 = vmatprep.subr.mxu0 0.0
        %1298 = vmatpush1.msra.mxu0 0.0
        %1299 = vmatprep.subr.mxu0 0.0
        %1300 = vmatpush1.msra.mxu0 0.0
        %1301 = vmatprep.subr.mxu0 0.0
        %1302 = vmatpush1.msra.mxu0 0.0
        %1303 = vmatprep.subr.mxu0 0.0
        %1304 = vmatpush1.msra.mxu0 0.0
        %1305 = vmatprep.mubr.f32.mxu0 0.0
        %1306 = vmatmul.mubr.f32.gmra.mrb[0].mxu0 %v1239
        %v1307 = vpop.f32.mrb[0].mxu0
        %v1308 = vadd.f32 0.0, %v1307
        %v1309 = vpop.f32.mrb[0].mxu0
        %1310 = vdwg.mxu0
        %v1319 = vrot.slane %v828, 7
        %v1320 = vsel %vm462, %v1319, %v748
        %v1321 = vrot.slane %v908, 6
        %v1322 = vsel %vm464, %v1321, %v1320
        %v1323 = vrot.slane %v988, 5
        %v1324 = vsel %vm466, %v1323, %v1322
        %v1325 = vrot.slane %v1068, 4
        %v1326 = vsel %vm468, %v1325, %v1324
        %v1327 = vrot.slane %v1148, 3
        %v1328 = vsel %vm470, %v1327, %v1326
        %v1329 = vrot.slane %v1228, 2
        %v1330 = vsel %vm472, %v1329, %v1328
        %v1331 = vrot.slane %v1308, 1
        %v1332 = vsel %vm474, %v1331, %v1330
        %1334 = vst [vmem:[%s219] sm:$0xff] %v1332
        %s1335 = sand.u32 %s138, 1
        %s1336 = scalar_lea.sflag [#allocation4], %s1335
        %s1337 = sand.u32 %s138, 1
        %s1338 = smul.addr %s1337, 8
        %s1339 = scalar_lea.vmem [#allocation3], %s1338
        // Predicated region
        $region41: #{tpu_custom_call.1} parent=39 // pred_check
          %p1340 = pneg %p148
        $region42: #{tpu_custom_call.1} parent=39 // pred_check_branch
          %1342 = sbr.rel (%p1340) target = $region44
        $region43: #{tpu_custom_call.1} parent=39 // pred_region
          %s1344 = ssub.s32 128, 128
          %1345 = vsyncadd %s1336, %s1344
          %s1346 = smul.addr %s20, 128
          %s1347 = scalar_lea.hbm %s5, %s1346
          %s1349 = sshll.u32 %s1339, 4
          %s1350 = int_to_ptr.vmem [resolvable:$true] %s1349
          %1352 = dma.vmem_to_hbm [thread:$0]  %s1350, 128, %s1347, %s1336
        $region44: #{tpu_custom_call.1} parent=39 // pred_fallthru
          _
      $region40: #{tpu_custom_call.1} parent=5 // pred_fallthru
        _
      %p1353 = scmp.le.s32.totalorder 2, %s15
      // Predicated region
      $region45: #{tpu_custom_call.1} parent=5 // pred_check
        %p1354 = pneg %p1353
      $region46: #{tpu_custom_call.1} parent=5 // pred_check_branch
        %1356 = sbr.rel (%p1354) target = $region48
      $region47: #{tpu_custom_call.1} parent=5 // pred_region
        %s1357 = ssub.s32 %s15, 2
        // Predicated region
        $region49: #{tpu_custom_call.1} parent=47 // pred_check
          %p1358 = pneg %p154
        $region50: #{tpu_custom_call.1} parent=47 // pred_check_branch
          %1360 = sbr.rel (%p1358) target = $region52
        $region51: #{tpu_custom_call.1} parent=47 // pred_region
          %s1361 = sand.u32 %s139, 1
          %s1362 = scalar_lea.sflag [#allocation4], %s1361
          %s1363 = sand.u32 %s139, 1
          %s1364 = smul.addr %s1363, 8
          %s1365 = scalar_lea.vmem [#allocation3], %s1364
          %1366 = dma.done %s1362, 128
        $region52: #{tpu_custom_call.1} parent=47 // pred_fallthru
          _
      $region48: #{tpu_custom_call.1} parent=5 // pred_fallthru
        _
    $region6: #{tpu_custom_call.1} parent=1 // loop_footer
      %s19 = sadd.s32 1, %s15
    $region7: #{tpu_custom_call.1} parent=1 // loop_footer_branch
      %14 = sbr.rel target = $region3
    $region8: #{tpu_custom_call.1} parent=1 // loop_exit
      _
    %1367 = vsyncpa [#allocation4], 1
    %s1368 = scalar_lea.sflag [#allocation4], 1
    %1369 = vsyncpa %s1368, 1

</llo_original>
